<compile_context>
chip_gen: v7x
topology: tpu7x:2x2x1
jax: 0.10.0
libtpu: 0.0.40
codegen_flags: <defaults>
</compile_context>

<pallas_src>
import functools

import numpy as np
import jax
import jax.numpy as jnp
from jax.experimental import pallas as pl
from jax.experimental.pallas import tpu as pltpu


def _round_up(v, m):
    return ((v + m - 1) // m) * m


def mlp_kernel(x_ref, w1t_ref, b1_ref, w2t_ref, b2_ref, o_ref):
    # Feature-major: x_ref is (F_in, TB) with batch on the lane axis.
    x = x_ref[...]                                                 # (F_in, TB)
    # (H, F_in) @ (F_in, TB) -> (H, TB), f32 accumulation on the MXU.
    h = jnp.dot(w1t_ref[...], x, preferred_element_type=jnp.float32)
    h = h + b1_ref[...]                                            # b1: (H, 1), lane-broadcast
    h = jnp.maximum(h, 0.0)                                        # ReLU (VPU)
    h = h.astype(w2t_ref.dtype)                                    # back to compute dtype for MXU
    # (F_out, H) @ (H, TB) -> (F_out, TB): MXU N = TB (lane-dense output).
    y = jnp.dot(w2t_ref[...], h, preferred_element_type=jnp.float32)
    y = y + b2_ref[...]                                            # b2: (F_out, 1)
    o_ref[...] = y.astype(o_ref.dtype)


@functools.partial(jax.jit, static_argnames=("compute_dtype", "tile_b"))
def mlp_forward(x, w1, b1, w2, b2, *, compute_dtype=jnp.bfloat16, tile_b=None):
    B, F_in = x.shape
    F_in_w, H = w1.shape
    H_w, F_out = w2.shape
    assert F_in == F_in_w and H == H_w

    # ---- choose a lane-dense batch tile -----------------------------------
    if tile_b is None:
        if B <= 128:
            tile_b = B                                 # single full-extent block
        else:
            # Multiple of 128 (full vreg lane groups), >= 2 grid steps when
            # possible (megacore on v7x), capped at 1024 rows.
            tile_b = min(1024, _round_up(pl.cdiv(B, 2), 128))
    elif tile_b != B:
        assert tile_b % 128 == 0, (
            "explicit tile_b must equal B or be a multiple of 128 (lane width)")

    n_tiles = pl.cdiv(B, tile_b)
    b_pad = n_tiles * tile_b

    # ---- wrapper-side layout plumbing: feature-major, cast, pad ------------
    x_t = x.T.astype(compute_dtype)                    # (F_in, B)
    if b_pad != B:
        x_t = jnp.pad(x_t, ((0, 0), (0, b_pad - B)))
    w1_t = w1.T.astype(compute_dtype)                  # (H, F_in)
    w2_t = w2.T.astype(compute_dtype)                  # (F_out, H)
    b1_c = b1.reshape(H, 1).astype(jnp.float32)
    b2_c = b2.reshape(F_out, 1).astype(jnp.float32)

    # ---- cost estimate + generation-aware VMEM budget ----------------------
    cbytes = np.dtype(compute_dtype).itemsize
    cost = pl.CostEstimate(
        flops=2 * b_pad * (F_in * H + H * F_out),
        transcendentals=0,
        bytes_accessed=int(F_in * b_pad * cbytes            # x stream
                           + (H * F_in + F_out * H) * cbytes  # weights
                           + (H + F_out) * 4                  # biases
                           + F_out * b_pad * 4),              # output
    )
    # Double-buffered x / out tiles (sublane-padded) + resident weights with
    # headroom; clamp to 32 MiB so it fits every generation's scoped VMEM
    # (v5e default 16 MiB, v7x physical 64 MiB).
    x_tile_bytes = _round_up(F_in, 8) * tile_b * cbytes
    o_tile_bytes = _round_up(F_out, 8) * tile_b * 4
    w_bytes = ((H * _round_up(F_in, 128) + _round_up(F_out, 8) * H) * cbytes
               + (H + F_out) * 128 * 4)
    vmem_limit = int(max(8 * 1024 * 1024,
                         min(32 * 1024 * 1024,
                             4 * (x_tile_bytes + o_tile_bytes) + 2 * w_bytes)))

    out_t = pl.pallas_call(
        mlp_kernel,
        out_shape=jax.ShapeDtypeStruct((F_out, b_pad), jnp.float32),
        grid_spec=pltpu.PrefetchScalarGridSpec(
            num_scalar_prefetch=0,
            grid=(n_tiles,),
            in_specs=[
                pl.BlockSpec((F_in, tile_b), lambda i: (0, i)),   # x (streamed)
                pl.BlockSpec((H, F_in),      lambda i: (0, 0)),   # W1^T (resident)
                pl.BlockSpec((H, 1),         lambda i: (0, 0)),   # b1   (resident)
                pl.BlockSpec((F_out, H),     lambda i: (0, 0)),   # W2^T (resident)
                pl.BlockSpec((F_out, 1),     lambda i: (0, 0)),   # b2   (resident)
            ],
            out_specs=pl.BlockSpec((F_out, tile_b), lambda i: (0, i)),
        ),
        compiler_params=pltpu.CompilerParams(
            dimension_semantics=("parallel",),
            vmem_limit_bytes=vmem_limit),
        cost_estimate=cost,
    )(x_t, w1_t, b1_c, w2_t, b2_c)

    out = out_t.T                                      # (b_pad, F_out)
    if b_pad != B:
        out = out[:B]
    return out.astype(x.dtype)


def init_params(key, features_in=20, hidden=128, features_out=7):
    # PyTorch-style default Linear init (uniform in +-1/sqrt(fan_in)),
    # stored as (in, out) so the reference is plain x @ W + b.
    k1, k2, k3, k4 = jax.random.split(key, 4)
    bound1 = 1.0 / jnp.sqrt(features_in)
    bound2 = 1.0 / jnp.sqrt(hidden)
    w1 = jax.random.uniform(k1, (features_in, hidden), jnp.float32, -bound1, bound1)
    b1 = jax.random.uniform(k2, (hidden,), jnp.float32, -bound1, bound1)
    w2 = jax.random.uniform(k3, (hidden, features_out), jnp.float32, -bound2, bound2)
    b2 = jax.random.uniform(k4, (features_out,), jnp.float32, -bound2, bound2)
    return w1, b1, w2, b2


if __name__ == "__main__":
    key = jax.random.PRNGKey(0)
    kx1, kx2, kp = jax.random.split(key, 3)

    F_in, H, F_out = 20, 128, 7
    w1, b1, w2, b2 = init_params(kp, F_in, H, F_out)

    def ref_fn(x):
        h = jnp.maximum(
            jnp.dot(x, w1, precision=jax.lax.Precision.HIGHEST) + b1, 0.0)
        return jnp.dot(h, w2, precision=jax.lax.Precision.HIGHEST) + b2

    # 1) tiny batch, f32 compute -> single full-extent block path.
    x_small = jax.random.normal(kx1, (8, F_in), dtype=jnp.float32)
    out_small = jax.block_until_ready(
        mlp_forward(x_small, w1, b1, w2, b2, compute_dtype=jnp.float32))
    assert out_small.shape == (8, F_out)
    assert jnp.allclose(out_small, ref_fn(x_small), atol=1e-2, rtol=1e-2)

    # 2) larger batch, bf16 compute -> multi-tile lane-dense path with padding
    #    (200 rows -> 2 tiles of 128, tail padded and sliced off).
    x_big = jax.random.normal(kx2, (200, F_in), dtype=jnp.float32)
    out_big = jax.block_until_ready(
        mlp_forward(x_big, w1, b1, w2, b2, compute_dtype=jnp.bfloat16))
    assert out_big.shape == (200, F_out)
    assert jnp.allclose(out_big, ref_fn(x_big), atol=3e-2, rtol=3e-2)

    print("KERNEL_OK")
</pallas_src>

<mosaic_0001>
module attributes {stable_mosaic.version = 11 : i64} {
  func.func @mlp_kernel(%arg0: i32, %arg1: memref<20x8xf32, #tpu.memory_space<vmem>>, %arg2: memref<128x20xf32, #tpu.memory_space<vmem>>, %arg3: memref<128x1xf32, #tpu.memory_space<vmem>>, %arg4: memref<7x128xf32, #tpu.memory_space<vmem>>, %arg5: memref<7x1xf32, #tpu.memory_space<vmem>>, %arg6: memref<7x8xf32, #tpu.memory_space<vmem>>) attributes {dimension_semantics = [#tpu.dimension_semantics<parallel>], iteration_bounds = array<i64: 1>, scalar_prefetch = 0 : i64, scratch_operands = 0 : i64, tpu.core_type = #tpu.core_type<tc>, window_params = [{transform_indices = @transform_0, window_bounds = array<i64: 20, 8>}, {pipeline_mode = #tpu.pipeline_mode<synchronous>, transform_indices = @transform_1, window_bounds = array<i64: 128, 20>}, {pipeline_mode = #tpu.pipeline_mode<synchronous>, transform_indices = @transform_2, window_bounds = array<i64: 128, 1>}, {pipeline_mode = #tpu.pipeline_mode<synchronous>, transform_indices = @transform_3, window_bounds = array<i64: 7, 128>}, {pipeline_mode = #tpu.pipeline_mode<synchronous>, transform_indices = @transform_4, window_bounds = array<i64: 7, 1>}, {transform_indices = @transform_5, window_bounds = array<i64: 7, 8>}]} {
    %c0 = arith.constant 0 : index
    %c0_0 = arith.constant 0 : index
    %0 = vector.load %arg1[%c0, %c0_0] : memref<20x8xf32, #tpu.memory_space<vmem>>, vector<20x8xf32>
    %c0_1 = arith.constant 0 : index
    %c0_2 = arith.constant 0 : index
    %1 = vector.load %arg2[%c0_1, %c0_2] : memref<128x20xf32, #tpu.memory_space<vmem>>, vector<128x20xf32>
    %cst = arith.constant dense<0.000000e+00> : vector<128x8xf32>
    %2 = tpu.matmul %1, %0, %cst {dimension_numbers = #tpu.dot_dimension_numbers<[1], [0], [0], [1], [0, 0, 1, 1], [], []>} : vector<128x20xf32>, vector<20x8xf32>, vector<128x8xf32> -> vector<128x8xf32>
    %c0_3 = arith.constant 0 : index
    %c0_4 = arith.constant 0 : index
    %3 = vector.load %arg3[%c0_3, %c0_4] : memref<128x1xf32, #tpu.memory_space<vmem>>, vector<128x1xf32>
    %4 = vector.broadcast %3 : vector<128x1xf32> to vector<128x8xf32>
    %5 = arith.addf %2, %4 : vector<128x8xf32>
    %cst_5 = arith.constant 0.000000e+00 : f32
    %6 = vector.broadcast %cst_5 : f32 to vector<128x8xf32>
    %7 = arith.maximumf %5, %6 : vector<128x8xf32>
    %c0_6 = arith.constant 0 : index
    %c0_7 = arith.constant 0 : index
    %8 = vector.load %arg4[%c0_6, %c0_7] : memref<7x128xf32, #tpu.memory_space<vmem>>, vector<7x128xf32>
    %cst_8 = arith.constant dense<0.000000e+00> : vector<7x8xf32>
    %9 = tpu.matmul %8, %7, %cst_8 {dimension_numbers = #tpu.dot_dimension_numbers<[1], [0], [0], [1], [0, 0, 1, 1], [], []>} : vector<7x128xf32>, vector<128x8xf32>, vector<7x8xf32> -> vector<7x8xf32>
    %c0_9 = arith.constant 0 : index
    %c0_10 = arith.constant 0 : index
    %10 = vector.load %arg5[%c0_9, %c0_10] : memref<7x1xf32, #tpu.memory_space<vmem>>, vector<7x1xf32>
    %11 = vector.broadcast %10 : vector<7x1xf32> to vector<7x8xf32>
    %12 = arith.addf %9, %11 : vector<7x8xf32>
    %c0_11 = arith.constant 0 : index
    %c0_12 = arith.constant 0 : index
    %13 = vector.load %arg6[%c0_11, %c0_12] : memref<7x8xf32, #tpu.memory_space<vmem>>, vector<7x8xf32>
    tpu.vector_store %arg6[%c0_11, %c0_12], %12 {strides = array<i32>} : memref<7x8xf32, #tpu.memory_space<vmem>>, vector<7x8xf32>,
    return
  }
  func.func @transform_0(%arg0: i32) -> (i32, i32) {
    %c0_i32 = arith.constant 0 : i32
    %c0_i32_0 = arith.constant 0 : i32
    return %c0_i32, %arg0 : i32, i32
  }
  func.func @transform_1(%arg0: i32) -> (i32, i32) {
    %c0_i32 = arith.constant 0 : i32
    %c0_i32_0 = arith.constant 0 : i32
    %c0_i32_1 = arith.constant 0 : i32
    return %c0_i32, %c0_i32_0 : i32, i32
  }
  func.func @transform_2(%arg0: i32) -> (i32, i32) {
    %c0_i32 = arith.constant 0 : i32
    %c0_i32_0 = arith.constant 0 : i32
    %c0_i32_1 = arith.constant 0 : i32
    return %c0_i32, %c0_i32_0 : i32, i32
  }
  func.func @transform_3(%arg0: i32) -> (i32, i32) {
    %c0_i32 = arith.constant 0 : i32
    %c0_i32_0 = arith.constant 0 : i32
    %c0_i32_1 = arith.constant 0 : i32
    return %c0_i32, %c0_i32_0 : i32, i32
  }
  func.func @transform_4(%arg0: i32) -> (i32, i32) {
    %c0_i32 = arith.constant 0 : i32
    %c0_i32_0 = arith.constant 0 : i32
    %c0_i32_1 = arith.constant 0 : i32
    return %c0_i32, %c0_i32_0 : i32, i32
  }
  func.func @transform_5(%arg0: i32) -> (i32, i32) {
    %c0_i32 = arith.constant 0 : i32
    %c0_i32_0 = arith.constant 0 : i32
    return %c0_i32, %arg0 : i32, i32
  }
}

</mosaic_0001>

<llo_original>
// kernel: mlp_forward.1
$region0: #{mlp_forward.1}
  #allocation0 [shape = 'u32[]', space=smem, size = 0x4, offset = 0x4, fixed_abs, tag = 'smem constant byte address 0x4 - core index']
  #allocation1 [shape = 'u32[144,128]{1,0:T(1,128)}', space=vmem, size = 0x12000, scoped, tag = 'internal scratch']
  %s0 = inlined_call_operand.vmem [shape: f32[20,8], index: 0, kind: input, shape index: {}]
  %s1 = inlined_call_operand.vmem [shape: f32[128,20], index: 1, kind: input, shape index: {}]
  %s2 = inlined_call_operand.vmem [shape: f32[128,1], index: 2, kind: input, shape index: {}]
  %s3 = inlined_call_operand.vmem [shape: f32[7,128], index: 3, kind: input, shape index: {}]
  %s4 = inlined_call_operand.vmem [shape: f32[7,1], index: 4, kind: input, shape index: {}]
  %s5 = inlined_call_operand.vmem [shape: f32[7,8], index: 5, kind: output, shape index: {}]
  %s6 = sld [smem:[#allocation0]]
  $region30: #{mlp_forward.1} parent=0
    _
  %s8 = ssub.s32 1, %s6
  %s9 = scalar_select 0, %s8, %s6
  // Predicated region
  $region2: #{mlp_forward.1} parent=0 // pred_check
    _
  $region3: #{mlp_forward.1} parent=0 // pred_check_branch
    %11 = sbr.rel (0) target = $region5
  $region4: #{mlp_forward.1} parent=0 // pred_region
    _
  $region5: #{mlp_forward.1} parent=0 // pred_fallthru
    _
  // Predicated region
  $region6: #{mlp_forward.1} parent=0 // pred_check
    _
  $region7: #{mlp_forward.1} parent=0 // pred_check_branch
    %13 = sbr.rel (0) target = $region9
  $region8: #{mlp_forward.1} parent=0 // pred_region
    _
  $region9: #{mlp_forward.1} parent=0 // pred_fallthru
    _
  // Predicated region
  $region10: #{mlp_forward.1} parent=0 // pred_check
    _
  $region11: #{mlp_forward.1} parent=0 // pred_check_branch
    %15 = sbr.rel (0) target = $region13
  $region12: #{mlp_forward.1} parent=0 // pred_region
    _
  $region13: #{mlp_forward.1} parent=0 // pred_fallthru
    _
  // Predicated region
  $region14: #{mlp_forward.1} parent=0 // pred_check
    _
  $region15: #{mlp_forward.1} parent=0 // pred_check_branch
    %17 = sbr.rel (0) target = $region17
  $region16: #{mlp_forward.1} parent=0 // pred_region
    _
  $region17: #{mlp_forward.1} parent=0 // pred_fallthru
    _
  // Predicated region
  $region18: #{mlp_forward.1} parent=0 // pred_check
    _
  $region19: #{mlp_forward.1} parent=0 // pred_check_branch
    %19 = sbr.rel (0) target = $region21
  $region20: #{mlp_forward.1} parent=0 // pred_region
    _
  $region21: #{mlp_forward.1} parent=0 // pred_fallthru
    _
  %v20 = vld [vmem:[%s0] sm:$0xff]
  %v21 = vld [vmem:[%s0 + $0x8] sm:$0xff]
  %v22 = vld [vmem:[%s0 + $0x10] sm:$0xf]
  %v23 = vld [vmem:[%s1] sm:$0xff]
  %v24 = vld [vmem:[%s1 + $0x8] sm:$0xff]
  %v25 = vld [vmem:[%s1 + $0x10] sm:$0xff]
  %v26 = vld [vmem:[%s1 + $0x18] sm:$0xff]
  %v27 = vld [vmem:[%s1 + $0x20] sm:$0xff]
  %v28 = vld [vmem:[%s1 + $0x28] sm:$0xff]
  %v29 = vld [vmem:[%s1 + $0x30] sm:$0xff]
  %v30 = vld [vmem:[%s1 + $0x38] sm:$0xff]
  %v31 = vld [vmem:[%s1 + $0x40] sm:$0xff]
  %v32 = vld [vmem:[%s1 + $0x48] sm:$0xff]
  %v33 = vld [vmem:[%s1 + $0x50] sm:$0xff]
  %v34 = vld [vmem:[%s1 + $0x58] sm:$0xff]
  %v35 = vld [vmem:[%s1 + $0x60] sm:$0xff]
  %v36 = vld [vmem:[%s1 + $0x68] sm:$0xff]
  %v37 = vld [vmem:[%s1 + $0x70] sm:$0xff]
  %v38 = vld [vmem:[%s1 + $0x78] sm:$0xff]
  %v39 = vld [vmem:[%s2] sm:$0xff]
  %v40 = vld [vmem:[%s2 + $0x8] sm:$0xff]
  %v41 = vld [vmem:[%s2 + $0x10] sm:$0xff]
  %v42 = vld [vmem:[%s2 + $0x18] sm:$0xff]
  %v43 = vld [vmem:[%s2 + $0x20] sm:$0xff]
  %v44 = vld [vmem:[%s2 + $0x28] sm:$0xff]
  %v45 = vld [vmem:[%s2 + $0x30] sm:$0xff]
  %v46 = vld [vmem:[%s2 + $0x38] sm:$0xff]
  %v47 = vld [vmem:[%s2 + $0x40] sm:$0xff]
  %v48 = vld [vmem:[%s2 + $0x48] sm:$0xff]
  %v49 = vld [vmem:[%s2 + $0x50] sm:$0xff]
  %v50 = vld [vmem:[%s2 + $0x58] sm:$0xff]
  %v51 = vld [vmem:[%s2 + $0x60] sm:$0xff]
  %v52 = vld [vmem:[%s2 + $0x68] sm:$0xff]
  %v53 = vld [vmem:[%s2 + $0x70] sm:$0xff]
  %v54 = vld [vmem:[%s2 + $0x78] sm:$0xff]
  %56 = vset.pattern.permute.xlu0 0
  %57 = vperm.xlu0 %56, %v39
  %v58 = vpop.permute.xlu0 %57
  %61 = vset.pattern.permute.xlu0 0
  %62 = vperm.xlu0 %61, %v40
  %v63 = vpop.permute.xlu0 %62
  %66 = vset.pattern.permute.xlu0 0
  %67 = vperm.xlu0 %66, %v41
  %v68 = vpop.permute.xlu0 %67
  %71 = vset.pattern.permute.xlu0 0
  %72 = vperm.xlu0 %71, %v42
  %v73 = vpop.permute.xlu0 %72
  %76 = vset.pattern.permute.xlu0 0
  %77 = vperm.xlu0 %76, %v43
  %v78 = vpop.permute.xlu0 %77
  %81 = vset.pattern.permute.xlu0 0
  %82 = vperm.xlu0 %81, %v44
  %v83 = vpop.permute.xlu0 %82
  %86 = vset.pattern.permute.xlu0 0
  %87 = vperm.xlu0 %86, %v45
  %v88 = vpop.permute.xlu0 %87
  %91 = vset.pattern.permute.xlu0 0
  %92 = vperm.xlu0 %91, %v46
  %v93 = vpop.permute.xlu0 %92
  %96 = vset.pattern.permute.xlu0 0
  %97 = vperm.xlu0 %96, %v47
  %v98 = vpop.permute.xlu0 %97
  %101 = vset.pattern.permute.xlu0 0
  %102 = vperm.xlu0 %101, %v48
  %v103 = vpop.permute.xlu0 %102
  %106 = vset.pattern.permute.xlu0 0
  %107 = vperm.xlu0 %106, %v49
  %v108 = vpop.permute.xlu0 %107
  %111 = vset.pattern.permute.xlu0 0
  %112 = vperm.xlu0 %111, %v50
  %v113 = vpop.permute.xlu0 %112
  %116 = vset.pattern.permute.xlu0 0
  %117 = vperm.xlu0 %116, %v51
  %v118 = vpop.permute.xlu0 %117
  %121 = vset.pattern.permute.xlu0 0
  %122 = vperm.xlu0 %121, %v52
  %v123 = vpop.permute.xlu0 %122
  %126 = vset.pattern.permute.xlu0 0
  %127 = vperm.xlu0 %126, %v53
  %v128 = vpop.permute.xlu0 %127
  %131 = vset.pattern.permute.xlu0 0
  %132 = vperm.xlu0 %131, %v54
  %v133 = vpop.permute.xlu0 %132
  %vm135 = vcmask 162816
  %v137 = vsel %vm135, %v23, 0
  %v140 = vsel %vm135, %v24, 0
  %v143 = vsel %vm135, %v25, 0
  %v146 = vsel %vm135, %v26, 0
  %v149 = vsel %vm135, %v27, 0
  %v152 = vsel %vm135, %v28, 0
  %v155 = vsel %vm135, %v29, 0
  %v158 = vsel %vm135, %v30, 0
  %v161 = vsel %vm135, %v31, 0
  %v164 = vsel %vm135, %v32, 0
  %v167 = vsel %vm135, %v33, 0
  %v170 = vsel %vm135, %v34, 0
  %v173 = vsel %vm135, %v35, 0
  %v176 = vsel %vm135, %v36, 0
  %v179 = vsel %vm135, %v37, 0
  %v182 = vsel %vm135, %v38, 0
  %vm184 = vcmask 1043456
  %v186 = vsel %vm184, %v22, 0
  %188 = vmatprep.subr.mxu0 0.0
  %189 = vmatpush1.msra.mxu0 %v20
  %190 = vmatprep.subr.mxu0 0.0
  %191 = vmatpush1.msra.mxu0 %v21
  %192 = vmatprep.subr.mxu0 0.0
  %193 = vmatpush1.msra.mxu0 %v186
  %194 = vmatprep.subr.mxu0 0.0
  %195 = vmatpush1.msra.mxu0 0.0
  %196 = vmatprep.subr.mxu0 0.0
  %197 = vmatpush1.msra.mxu0 0.0
  %198 = vmatprep.subr.mxu0 0.0
  %199 = vmatpush1.msra.mxu0 0.0
  %200 = vmatprep.subr.mxu0 0.0
  %201 = vmatpush1.msra.mxu0 0.0
  %202 = vmatprep.subr.mxu0 0.0
  %203 = vmatpush1.msra.mxu0 0.0
  %204 = vmatprep.subr.mxu0 0.0
  %205 = vmatpush1.msra.mxu0 0.0
  %206 = vmatprep.subr.mxu0 0.0
  %207 = vmatpush1.msra.mxu0 0.0
  %208 = vmatprep.subr.mxu0 0.0
  %209 = vmatpush1.msra.mxu0 0.0
  %210 = vmatprep.subr.mxu0 0.0
  %211 = vmatpush1.msra.mxu0 0.0
  %212 = vmatprep.subr.mxu0 0.0
  %213 = vmatpush1.msra.mxu0 0.0
  %214 = vmatprep.subr.mxu0 0.0
  %215 = vmatpush1.msra.mxu0 0.0
  %216 = vmatprep.subr.mxu0 0.0
  %217 = vmatpush1.msra.mxu0 0.0
  %218 = vmatprep.subr.mxu0 0.0
  %219 = vmatpush1.msra.mxu0 0.0
  %220 = vmatprep.subr.mxu0 0.0
  %221 = vmatpush1.msra.mxu0 0.0
  %222 = vmatprep.subr.mxu0 0.0
  %223 = vmatpush1.msra.mxu0 0.0
  %224 = vmatprep.subr.mxu0 0.0
  %225 = vmatpush1.msra.mxu0 0.0
  %226 = vmatprep.subr.mxu0 0.0
  %227 = vmatpush1.msra.mxu0 0.0
  %228 = vmatprep.subr.mxu0 0.0
  %229 = vmatpush1.msra.mxu0 0.0
  %230 = vmatprep.subr.mxu0 0.0
  %231 = vmatpush1.msra.mxu0 0.0
  %232 = vmatprep.subr.mxu0 0.0
  %233 = vmatpush1.msra.mxu0 0.0
  %234 = vmatprep.subr.mxu0 0.0
  %235 = vmatpush1.msra.mxu0 0.0
  %236 = vmatprep.subr.mxu0 0.0
  %237 = vmatpush1.msra.mxu0 0.0
  %238 = vmatprep.subr.mxu0 0.0
  %239 = vmatpush1.msra.mxu0 0.0
  %240 = vmatprep.subr.mxu0 0.0
  %241 = vmatpush1.msra.mxu0 0.0
  %242 = vmatprep.subr.mxu0 0.0
  %243 = vmatpush1.msra.mxu0 0.0
  %244 = vmatprep.subr.mxu0 0.0
  %245 = vmatpush1.msra.mxu0 0.0
  %246 = vmatprep.subr.mxu0 0.0
  %247 = vmatpush1.msra.mxu0 0.0
  %248 = vmatprep.subr.mxu0 0.0
  %249 = vmatpush1.msra.mxu0 0.0
  %250 = vmatprep.subr.mxu0 0.0
  %251 = vmatpush1.msra.mxu0 0.0
  %252 = vmatprep.mubr.f32.mxu0 0.0
  %253 = vmatmul.mubr.f32.gmra.mrb[0].mxu0 %v137
  %v254 = vpop.f32.mrb[0].mxu0
  %v255 = vadd.f32 %v58, %v254
  %v256 = vpop.f32.mrb[0].mxu0
  %257 = vmatprep.mubr.f32.mxu0 0.0
  %258 = vmatmul.mubr.f32.gmra.mrb[0].mxu0 %v140
  %v259 = vpop.f32.mrb[0].mxu0
  %v260 = vadd.f32 %v63, %v259
  %v261 = vpop.f32.mrb[0].mxu0
  %262 = vmatprep.mubr.f32.mxu0 0.0
  %263 = vmatmul.mubr.f32.gmra.mrb[0].mxu0 %v143
  %v264 = vpop.f32.mrb[0].mxu0
  %v265 = vadd.f32 %v68, %v264
  %v266 = vpop.f32.mrb[0].mxu0
  %267 = vmatprep.mubr.f32.mxu0 0.0
  %268 = vmatmul.mubr.f32.gmra.mrb[0].mxu0 %v146
  %v269 = vpop.f32.mrb[0].mxu0
  %v270 = vadd.f32 %v73, %v269
  %v271 = vpop.f32.mrb[0].mxu0
  %272 = vmatprep.mubr.f32.mxu0 0.0
  %273 = vmatmul.mubr.f32.gmra.mrb[0].mxu0 %v149
  %v274 = vpop.f32.mrb[0].mxu0
  %v275 = vadd.f32 %v78, %v274
  %v276 = vpop.f32.mrb[0].mxu0
  %277 = vmatprep.mubr.f32.mxu0 0.0
  %278 = vmatmul.mubr.f32.gmra.mrb[0].mxu0 %v152
  %v279 = vpop.f32.mrb[0].mxu0
  %v280 = vadd.f32 %v83, %v279
  %v281 = vpop.f32.mrb[0].mxu0
  %282 = vmatprep.mubr.f32.mxu0 0.0
  %283 = vmatmul.mubr.f32.gmra.mrb[0].mxu0 %v155
  %v284 = vpop.f32.mrb[0].mxu0
  %v285 = vadd.f32 %v88, %v284
  %v286 = vpop.f32.mrb[0].mxu0
  %287 = vmatprep.mubr.f32.mxu0 0.0
  %288 = vmatmul.mubr.f32.gmra.mrb[0].mxu0 %v158
  %v289 = vpop.f32.mrb[0].mxu0
  %v290 = vadd.f32 %v93, %v289
  %v291 = vpop.f32.mrb[0].mxu0
  %292 = vmatprep.mubr.f32.mxu0 0.0
  %293 = vmatmul.mubr.f32.gmra.mrb[0].mxu0 %v161
  %v294 = vpop.f32.mrb[0].mxu0
  %v295 = vadd.f32 %v98, %v294
  %v296 = vpop.f32.mrb[0].mxu0
  %297 = vmatprep.mubr.f32.mxu0 0.0
  %298 = vmatmul.mubr.f32.gmra.mrb[0].mxu0 %v164
  %v299 = vpop.f32.mrb[0].mxu0
  %v300 = vadd.f32 %v103, %v299
  %v301 = vpop.f32.mrb[0].mxu0
  %302 = vmatprep.mubr.f32.mxu0 0.0
  %303 = vmatmul.mubr.f32.gmra.mrb[0].mxu0 %v167
  %v304 = vpop.f32.mrb[0].mxu0
  %v305 = vadd.f32 %v108, %v304
  %v306 = vpop.f32.mrb[0].mxu0
  %307 = vmatprep.mubr.f32.mxu0 0.0
  %308 = vmatmul.mubr.f32.gmra.mrb[0].mxu0 %v170
  %v309 = vpop.f32.mrb[0].mxu0
  %v310 = vadd.f32 %v113, %v309
  %v311 = vpop.f32.mrb[0].mxu0
  %312 = vmatprep.mubr.f32.mxu0 0.0
  %313 = vmatmul.mubr.f32.gmra.mrb[0].mxu0 %v173
  %v314 = vpop.f32.mrb[0].mxu0
  %v315 = vadd.f32 %v118, %v314
  %v316 = vpop.f32.mrb[0].mxu0
  %317 = vmatprep.mubr.f32.mxu0 0.0
  %318 = vmatmul.mubr.f32.gmra.mrb[0].mxu0 %v176
  %v319 = vpop.f32.mrb[0].mxu0
  %v320 = vadd.f32 %v123, %v319
  %v321 = vpop.f32.mrb[0].mxu0
  %322 = vmatprep.mubr.f32.mxu0 0.0
  %323 = vmatmul.mubr.f32.gmra.mrb[0].mxu0 %v179
  %v324 = vpop.f32.mrb[0].mxu0
  %v325 = vadd.f32 %v128, %v324
  %v326 = vpop.f32.mrb[0].mxu0
  %327 = vmatprep.mubr.f32.mxu0 0.0
  %328 = vmatmul.mubr.f32.gmra.mrb[0].mxu0 %v182
  %v329 = vpop.f32.mrb[0].mxu0
  %v330 = vadd.f32 %v133, %v329
  %v331 = vpop.f32.mrb[0].mxu0
  %332 = vdwg.mxu0
  %v333 = vmax.f32 %v255, 0.0
  %v334 = vmax.f32 %v260, 0.0
  %v335 = vmax.f32 %v265, 0.0
  %v336 = vmax.f32 %v270, 0.0
  %v337 = vmax.f32 %v275, 0.0
  %v338 = vmax.f32 %v280, 0.0
  %v339 = vmax.f32 %v285, 0.0
  %v340 = vmax.f32 %v290, 0.0
  %v341 = vmax.f32 %v295, 0.0
  %v342 = vmax.f32 %v300, 0.0
  %v343 = vmax.f32 %v305, 0.0
  %v344 = vmax.f32 %v310, 0.0
  %v345 = vmax.f32 %v315, 0.0
  %v346 = vmax.f32 %v320, 0.0
  %v347 = vmax.f32 %v325, 0.0
  %v348 = vmax.f32 %v330, 0.0
  %v349 = vld [vmem:[%s3] sm:$0x7f]
  %v350 = vld [vmem:[%s4] sm:$0x7f]
  %352 = vset.pattern.permute.xlu0 0
  %353 = vperm.xlu0 %352, %v350
  %v354 = vpop.permute.xlu0 %353
  %356 = vmatprep.subr.mxu0 0.0
  %357 = vmatpush1.msra.mxu0 %v333
  %358 = vmatprep.subr.mxu0 0.0
  %359 = vmatpush1.msra.mxu0 %v334
  %360 = vmatprep.subr.mxu0 0.0
  %361 = vmatpush1.msra.mxu0 %v335
  %362 = vmatprep.subr.mxu0 0.0
  %363 = vmatpush1.msra.mxu0 %v336
  %364 = vmatprep.subr.mxu0 0.0
  %365 = vmatpush1.msra.mxu0 %v337
  %366 = vmatprep.subr.mxu0 0.0
  %367 = vmatpush1.msra.mxu0 %v338
  %368 = vmatprep.subr.mxu0 0.0
  %369 = vmatpush1.msra.mxu0 %v339
  %370 = vmatprep.subr.mxu0 0.0
  %371 = vmatpush1.msra.mxu0 %v340
  %372 = vmatprep.subr.mxu0 0.0
  %373 = vmatpush1.msra.mxu0 %v341
  %374 = vmatprep.subr.mxu0 0.0
  %375 = vmatpush1.msra.mxu0 %v342
  %376 = vmatprep.subr.mxu0 0.0
  %377 = vmatpush1.msra.mxu0 %v343
  %378 = vmatprep.subr.mxu0 0.0
  %379 = vmatpush1.msra.mxu0 %v344
  %380 = vmatprep.subr.mxu0 0.0
  %381 = vmatpush1.msra.mxu0 %v345
  %382 = vmatprep.subr.mxu0 0.0
  %383 = vmatpush1.msra.mxu0 %v346
  %384 = vmatprep.subr.mxu0 0.0
  %385 = vmatpush1.msra.mxu0 %v347
  %386 = vmatprep.subr.mxu0 0.0
  %387 = vmatpush1.msra.mxu0 %v348
  %388 = vmatprep.subr.mxu0 0.0
  %389 = vmatpush1.msra.mxu0 0.0
  %390 = vmatprep.subr.mxu0 0.0
  %391 = vmatpush1.msra.mxu0 0.0
  %392 = vmatprep.subr.mxu0 0.0
  %393 = vmatpush1.msra.mxu0 0.0
  %394 = vmatprep.subr.mxu0 0.0
  %395 = vmatpush1.msra.mxu0 0.0
  %396 = vmatprep.subr.mxu0 0.0
  %397 = vmatpush1.msra.mxu0 0.0
  %398 = vmatprep.subr.mxu0 0.0
  %399 = vmatpush1.msra.mxu0 0.0
  %400 = vmatprep.subr.mxu0 0.0
  %401 = vmatpush1.msra.mxu0 0.0
  %402 = vmatprep.subr.mxu0 0.0
  %403 = vmatpush1.msra.mxu0 0.0
  %404 = vmatprep.subr.mxu0 0.0
  %405 = vmatpush1.msra.mxu0 0.0
  %406 = vmatprep.subr.mxu0 0.0
  %407 = vmatpush1.msra.mxu0 0.0
  %408 = vmatprep.subr.mxu0 0.0
  %409 = vmatpush1.msra.mxu0 0.0
  %410 = vmatprep.subr.mxu0 0.0
  %411 = vmatpush1.msra.mxu0 0.0
  %412 = vmatprep.subr.mxu0 0.0
  %413 = vmatpush1.msra.mxu0 0.0
  %414 = vmatprep.subr.mxu0 0.0
  %415 = vmatpush1.msra.mxu0 0.0
  %416 = vmatprep.subr.mxu0 0.0
  %417 = vmatpush1.msra.mxu0 0.0
  %418 = vmatprep.subr.mxu0 0.0
  %419 = vmatpush1.msra.mxu0 0.0
  %420 = vmatprep.mubr.f32.mxu0 0.0
  %421 = vmatmul.mubr.f32.gmra.mrb[0].mxu0 %v349
  %v422 = vpop.f32.mrb[0].mxu0
  %v423 = vadd.f32 %v354, %v422
  %v424 = vpop.f32.mrb[0].mxu0
  %425 = vdwg.mxu0
  %vm426 = vcmask 63488
  %427 = vst.msk [vmem:[%s5] sm:$0x7f] %vm426, %v423
  // Predicated region
  $region22: #{mlp_forward.1} parent=0 // pred_check
    _
  $region23: #{mlp_forward.1} parent=0 // pred_check_branch
    %429 = sbr.rel (0) target = $region25
  $region24: #{mlp_forward.1} parent=0 // pred_region
    _
  $region25: #{mlp_forward.1} parent=0 // pred_fallthru
    _
  // Predicated region
  $region26: #{mlp_forward.1} parent=0 // pred_check
    _
  $region27: #{mlp_forward.1} parent=0 // pred_check_branch
    %431 = sbr.rel (0) target = $region29
  $region28: #{mlp_forward.1} parent=0 // pred_region
    _
  $region29: #{mlp_forward.1} parent=0 // pred_fallthru
    _

</llo_original>
